<compile_context>
chip_gen: v5e
topology: v5e:2x2
jax: 0.10.0
libtpu: 0.0.40
codegen_flags: <defaults>
</compile_context>

<pallas_src>
import numpy as np
import jax
import jax.numpy as jnp
from jax.experimental import pallas as pl
from jax.experimental.pallas import tpu as pltpu


def _pp_plik1_kernel(mu_ref, cov_ref, out_ref):
    # exponential link with the Gauss-Legendre weights pre-folded into mu:
    #   lambda = exp(mu + log(ww) + 0.5*cov)  ==  exp(mu + 0.5*cov) * ww
    # one exp per element (EUP); the add/scale rides the VPU slots, the final
    # reduce goes to the XLU -- all different bundle slots.
    lam = jnp.exp(mu_ref[...] + 0.5 * cov_ref[...])        # (R_BLK, C_BLK)
    out_ref[...] = jnp.sum(lam).reshape(1, 1, 1)            # per-block partial sum


def _round_up(x, m):
    return ((x + m - 1) // m) * m


def point_process_forward(mu_sp_list, cov_sp_list, mu_qu, cov_qu, wwLeg,
                          *, target_block_bytes=1 << 20):
    """Exponential-link PointProcess expected log-likelihood (forward pass).

    mu_sp_list / cov_sp_list: lists (len R) of [N_r, 1] arrays
        (cov_sp is unused in the exponential-link branch, matching the torch code).
    mu_qu, cov_qu: [R, nLeg, D, 1] (torch convention) or [R, nLeg, D]
    wwLeg:         [R, nLeg]   (strictly positive Gauss-Legendre weights)
    Returns scalar ell = -plik1 + plik2.
    """
    del cov_sp_list  # unused for the exponential link (matches the torch code)

    R, L, D = int(mu_qu.shape[0]), int(mu_qu.shape[1]), int(mu_qu.shape[2])
    C = L * D

    # lane-dense 2D layout: one row per trial, nodes*neurons on lanes.
    mu2 = mu_qu.reshape(R, C).astype(jnp.float32)
    cov2 = cov_qu.reshape(R, C).astype(jnp.float32)
    # fold log(ww) into mu (GL weights are strictly positive); the broadcast + add
    # fuses into the pad below, so no separate full-size weight array hits HBM.
    logw = jnp.log(wwLeg.astype(jnp.float32))
    mu2 = mu2 + jnp.broadcast_to(logw[:, :, None], (R, L, D)).reshape(R, C)

    # ---- tiling -------------------------------------------------------------
    row_bytes = C * 4
    if C <= 128 or 8 * row_bytes <= target_block_bytes:
        # full lane extent per block (legal: block dim == full array dim) -> no lane pad
        C_BLK = C
        C_pad = C
    else:
        # lane tiling: 128-multiple block that divides the 128-padded extent
        C_pad = _round_up(C, 128)
        n128 = C_pad // 128
        d_max = max(1, target_block_bytes // (8 * 4 * 128))
        d = max(dd for dd in range(1, n128 + 1) if n128 % dd == 0 and dd <= d_max)
        C_BLK = 128 * d

    rows_target = max(8, (target_block_bytes // max(C_BLK * 4, 1)) // 8 * 8)
    R_BLK = int(min(_round_up(R, 8), rows_target))
    R_pad = _round_up(R, R_BLK)
    NR, NC = R_pad // R_BLK, C_pad // C_BLK

    # pad: mu -> -1e30 so exp() of padded rows/lanes is exactly 0; cov -> 0.
    mu2 = jnp.pad(mu2, ((0, R_pad - R), (0, C_pad - C)), constant_values=-1e30)
    cov2 = jnp.pad(cov2, ((0, R_pad - R), (0, C_pad - C)), constant_values=0.0)

    qspec = pl.BlockSpec((R_BLK, C_BLK), lambda i, j: (i, j))
    partials = pl.pallas_call(
        _pp_plik1_kernel,
        out_shape=jax.ShapeDtypeStruct((NR * NC, 1, 1), jnp.float32),
        grid=(NR, NC),
        in_specs=[qspec, qspec],
        out_specs=pl.BlockSpec((1, 1, 1), lambda i, j: (i * NC + j, 0, 0)),
        compiler_params=pltpu.CompilerParams(
            dimension_semantics=("parallel", "parallel"),
            vmem_limit_bytes=32 * 1024 * 1024),
    )(mu2, cov2)

    plik1 = jnp.sum(partials)
    # plik2: sum of the ragged per-trial spike means (log_link == mu_sp for the
    # exponential link) -- a plain XLA reduce is strictly cheaper than streaming a
    # padded lane-1 block through the kernel.
    plik2 = jnp.sum(jnp.concatenate(
        [jnp.asarray(m, jnp.float32).reshape(-1) for m in mu_sp_list]))
    return plik2 - plik1


def _gauss_legendre(n, a, b):
    # deterministic "parameter" init matching PointProcess.__init__ (gauss_legendre)
    x, w = np.polynomial.legendre.leggauss(n)
    xx = 0.5 * (b - a) * x + 0.5 * (b + a)
    ww = 0.5 * (b - a) * w
    return xx.astype(np.float32), ww.astype(np.float32)


if __name__ == "__main__":
    key = jax.random.PRNGKey(0)
    R, nLeg, D = 2, 8, 4                      # trials, Legendre nodes, neurons
    trLen = [1.0, 1.5]
    nSpikes = [5, 7]

    # Gauss-Legendre weights per trial (module "parameters"; strictly positive)
    wwLeg = jnp.asarray(
        np.stack([_gauss_legendre(nLeg, 0.0, trLen[r])[1] for r in range(R)]))

    keys = jax.random.split(key, 6)
    mu_qu = jax.random.normal(keys[0], (R, nLeg, D, 1), jnp.float32)
    cov_qu = 0.1 * jnp.abs(jax.random.normal(keys[1], (R, nLeg, D, 1), jnp.float32))
    mu_sp = [jax.random.normal(keys[2 + r], (nSpikes[r], 1), jnp.float32)
             for r in range(R)]
    cov_sp = [0.1 * jnp.abs(jax.random.normal(keys[4 + r], (nSpikes[r], 1), jnp.float32))
              for r in range(R)]

    ell = point_process_forward(mu_sp, cov_sp, mu_qu, cov_qu, wwLeg)
    ell = jax.block_until_ready(ell)

    # pure-JAX reference (torch semantics, exponential link)
    plik1 = jnp.sum(jnp.exp(mu_qu + 0.5 * cov_qu) * wwLeg[:, :, None, None])
    plik2 = jnp.sum(jnp.concatenate(mu_sp, axis=0))
    ref = -plik1 + plik2
    assert jnp.allclose(ell, ref, rtol=1e-5, atol=1e-4), (ell, ref)

    # TODO(synk): non-exponential link branch (Gauss-Hermite quadrature + bmm) not implemented.
    print("KERNEL_OK")
</pallas_src>

<mosaic_0001>
module attributes {stable_mosaic.version = 11 : i64} {
  func.func @_pp_plik1_kernel(%arg0: i32, %arg1: i32, %arg2: memref<8x32xf32, #tpu.memory_space<vmem>>, %arg3: memref<8x32xf32, #tpu.memory_space<vmem>>, %arg4: memref<1x1x1xf32, #tpu.memory_space<vmem>>) attributes {dimension_semantics = [#tpu.dimension_semantics<parallel>, #tpu.dimension_semantics<parallel>], iteration_bounds = array<i64: 1, 1>, scalar_prefetch = 0 : i64, scratch_operands = 0 : i64, tpu.core_type = #tpu.core_type<tc>, window_params = [{transform_indices = @transform_0, window_bounds = array<i64: 8, 32>}, {transform_indices = @transform_1, window_bounds = array<i64: 8, 32>}, {transform_indices = @transform_2, window_bounds = array<i64: 1, 1, 1>}]} {
    %c0 = arith.constant 0 : index
    %c0_0 = arith.constant 0 : index
    %0 = vector.load %arg2[%c0, %c0_0] : memref<8x32xf32, #tpu.memory_space<vmem>>, vector<8x32xf32>
    %c0_1 = arith.constant 0 : index
    %c0_2 = arith.constant 0 : index
    %1 = vector.load %arg3[%c0_1, %c0_2] : memref<8x32xf32, #tpu.memory_space<vmem>>, vector<8x32xf32>
    %cst = arith.constant 5.000000e-01 : f32
    %2 = vector.broadcast %cst : f32 to vector<8x32xf32>
    %3 = arith.mulf %2, %1 : vector<8x32xf32>
    %4 = arith.addf %0, %3 : vector<8x32xf32>
    %5 = math.exp %4 : vector<8x32xf32>
    %6 = vector.shape_cast %5 : vector<8x32xf32> to vector<1x8x32xf32>
    %cst_3 = arith.constant dense<0.000000e+00> : vector<1xf32>
    %7 = vector.multi_reduction <add>, %6, %cst_3 [1, 2] : vector<1x8x32xf32> to vector<1xf32>
    %8 = vector.shape_cast %7 : vector<1xf32> to vector<1x1x1xf32>
    %9 = vector.extract %8[0, 0, 0] : f32 from vector<1x1x1xf32>
    %10 = vector.broadcast %9 : f32 to vector<1x1x1xf32>
    %c0_4 = arith.constant 0 : index
    %c0_5 = arith.constant 0 : index
    %c0_6 = arith.constant 0 : index
    %11 = vector.load %arg4[%c0_4, %c0_5, %c0_6] : memref<1x1x1xf32, #tpu.memory_space<vmem>>, vector<1x1x1xf32>
    tpu.vector_store %arg4[%c0_4, %c0_5, %c0_6], %10 {strides = array<i32>} : memref<1x1x1xf32, #tpu.memory_space<vmem>>, vector<1x1x1xf32>,
    return
  }
  func.func @transform_0(%arg0: i32, %arg1: i32) -> (i32, i32) {
    %c0_i32 = arith.constant 0 : i32
    return %arg0, %arg1 : i32, i32
  }
  func.func @transform_1(%arg0: i32, %arg1: i32) -> (i32, i32) {
    %c0_i32 = arith.constant 0 : i32
    return %arg0, %arg1 : i32, i32
  }
  func.func @transform_2(%arg0: i32, %arg1: i32) -> (i32, i32, i32) {
    %c1_i32 = arith.constant 1 : i32
    %0 = arith.muli %arg0, %c1_i32 : i32
    %1 = arith.addi %0, %arg1 : i32
    %c0_i32 = arith.constant 0 : i32
    %c0_i32_0 = arith.constant 0 : i32
    %c0_i32_1 = arith.constant 0 : i32
    return %1, %c0_i32, %c0_i32_0 : i32, i32, i32
  }
}

</mosaic_0001>

<llo_original>
// kernel: tpu_custom_call.1
$region0: #{tpu_custom_call.1}
  #allocation0 [shape = 'u32[]', space=smem, size = 0x4, offset = 0x4, fixed_abs, tag = 'smem constant byte address 0x4 - core index']
  #allocation1 [shape = 'u32[72,128]{1,0:T(1,128)}', space=vmem, size = 0x9000, scoped, tag = 'internal scratch']
  %s0 = inlined_call_operand.hbm [shape: f32[8,32], index: 0, kind: input, shape index: {}]
  %s1 = inlined_call_operand.hbm [shape: f32[8,32], index: 1, kind: input, shape index: {}]
  %s2 = inlined_call_operand.hbm [shape: f32[1,1,1], index: 2, kind: output, shape index: {}]
  %s3 = sld [smem:[#allocation0]]
  $region26: #{tpu_custom_call.1} parent=0
    _
  %s5 = ssub.s32 1, %s3
  %s6 = scalar_select 0, %s5, %s3
  $region1: #{tpu_custom_call.1} parent=0
    #allocation2 [shape = 'u8[4096]{0}', space=vmem, size = 0x1000, scoped, tag = 'input window, operand 0, single buffered']
    #allocation3 [shape = 's32[1]{0}', space=sflag, size = 0x4, scoped, tag = 'scoped memory for tpu_custom_call.1']
    #allocation4 [shape = 's32[1]{0}', space=sflag, size = 0x4, scoped, tag = 'scoped memory for tpu_custom_call.1']
    #allocation5 [shape = 'u8[4096]{0}', space=vmem, size = 0x1000, scoped, tag = 'input window, operand 1, single buffered']
    #allocation6 [shape = 's32[1]{0}', space=sflag, size = 0x4, scoped, tag = 'scoped memory for tpu_custom_call.1']
    #allocation7 [shape = 'u8[512]{0}', space=vmem, size = 0x400, scoped, tag = 'output window, operand 0, single buffered']
    %7 = vsyncpa [#allocation3], 0
    %8 = vsyncpa [#allocation6], 0
    %9 = vsyncpa [#allocation4], 0
    // Predicated region
    $region2: #{tpu_custom_call.1} parent=1 // pred_check
      _
    $region3: #{tpu_custom_call.1} parent=1 // pred_check_branch
      %11 = sbr.rel (0) target = $region5
    $region4: #{tpu_custom_call.1} parent=1 // pred_region
      %13 = vsyncadd [#allocation3], 0
      %s15 = sshll.u32 %s0, 4
      %s16 = int_to_ptr.hbm [resolvable:$true] %s15
      %s17 = sshll.u32 [#allocation2], 4
      %s18 = int_to_ptr.vmem [resolvable:$true] %s17
      %20 = dma.hbm_to_vmem [thread:$0]  %s16, 128, %s18, [#allocation3]
    $region5: #{tpu_custom_call.1} parent=1 // pred_fallthru
      _
    // Predicated region
    $region6: #{tpu_custom_call.1} parent=1 // pred_check
      _
    $region7: #{tpu_custom_call.1} parent=1 // pred_check_branch
      %22 = sbr.rel (0) target = $region9
    $region8: #{tpu_custom_call.1} parent=1 // pred_region
      %24 = vsyncadd [#allocation6], 0
      %s26 = sshll.u32 %s1, 4
      %s27 = int_to_ptr.hbm [resolvable:$true] %s26
      %s28 = sshll.u32 [#allocation5], 4
      %s29 = int_to_ptr.vmem [resolvable:$true] %s28
      %31 = dma.hbm_to_vmem [thread:$0]  %s27, 128, %s29, [#allocation6]
    $region9: #{tpu_custom_call.1} parent=1 // pred_fallthru
      _
    // Predicated region
    $region10: #{tpu_custom_call.1} parent=1 // pred_check
      _
    $region11: #{tpu_custom_call.1} parent=1 // pred_check_branch
      %33 = sbr.rel (0) target = $region13
    $region12: #{tpu_custom_call.1} parent=1 // pred_region
      %35 = dma.done [#allocation3], 128
    $region13: #{tpu_custom_call.1} parent=1 // pred_fallthru
      _
    // Predicated region
    $region14: #{tpu_custom_call.1} parent=1 // pred_check
      _
    $region15: #{tpu_custom_call.1} parent=1 // pred_check_branch
      %37 = sbr.rel (0) target = $region17
    $region16: #{tpu_custom_call.1} parent=1 // pred_region
      %39 = dma.done [#allocation6], 128
    $region17: #{tpu_custom_call.1} parent=1 // pred_fallthru
      _
    %s40 = sadd.s32 0, 0
    %v41 = vld [vmem:[#allocation2] sm:$0xff]
    %v42 = vld [vmem:[#allocation5] sm:$0xff]
    %v43 = vmul.f32 %v42, 0.5
    %v44 = vadd.f32 %v41, %v43
    %v45 = vmul.f32 %v44, 1.442695
    %v46 = vpow.pop %v45
    %vm47 = vcmask 261120
    %v48 = vsel %vm47, %v46, 0.0
    %49 = vadd.xlane.f32.xlu0 %v48
    %v50 = vpop.xlane.xlu0 %49
    %v51 = vrot.slane %v50, 4
    %v52 = vadd.f32 %v50, %v51
    %v53 = vrot.slane %v52, 2
    %v54 = vadd.f32 %v52, %v53
    %v55 = vrot.slane %v54, 1
    %v56 = vadd.f32 %v54, %v55
    %s57 = vtos %v56
    %v58 = vstv %s57
    %vm59 = vcmask 0
    %60 = vst.msk [vmem:[#allocation7] sm:$0x1] %vm59, %v58
    // Predicated region
    $region18: #{tpu_custom_call.1} parent=1 // pred_check
      _
    $region19: #{tpu_custom_call.1} parent=1 // pred_check_branch
      %62 = sbr.rel (0) target = $region21
    $region20: #{tpu_custom_call.1} parent=1 // pred_region
      %s63 = sadd.s32 0, 0
      %65 = vsyncadd [#allocation4], 0
      %s66 = scalar_lea.hbm %s2, %s63
      %s68 = sshll.u32 [#allocation7], 4
      %s69 = int_to_ptr.vmem [resolvable:$true] %s68
      %s70 = sshll.u32 %s66, 4
      %s71 = int_to_ptr.hbm [resolvable:$true] %s70
      %73 = dma.vmem_to_hbm [thread:$0]  %s69, 16, %s71, [#allocation4]
    $region21: #{tpu_custom_call.1} parent=1 // pred_fallthru
      _
    // Predicated region
    $region22: #{tpu_custom_call.1} parent=1 // pred_check
      _
    $region23: #{tpu_custom_call.1} parent=1 // pred_check_branch
      %75 = sbr.rel (0) target = $region25
    $region24: #{tpu_custom_call.1} parent=1 // pred_region
      %77 = dma.done [#allocation4], 16
    $region25: #{tpu_custom_call.1} parent=1 // pred_fallthru
      _
    %78 = vsyncpa [#allocation3], 1
    %79 = vsyncpa [#allocation6], 1
    %80 = vsyncpa [#allocation4], 1

</llo_original>
